<compile_context>
chip_gen: v7x
topology: tpu7x:2x2x1
jax: 0.10.0
libtpu: 0.0.40
codegen_flags: <defaults>
</compile_context>

<pallas_src>
from typing import Any, NamedTuple

import jax
import jax.numpy as jnp
from jax.experimental import pallas as pl
from jax.experimental.pallas import tpu as pltpu

_LANE = 128
_MIB = 1024 * 1024
_VMEM_BUDGET = 44 * _MIB   # conservative: leaves headroom inside v7x's 64 MiB VMEM


def _round_up(x, m):
    return ((x + m - 1) // m) * m


def _cdiv(a, b):
    return (a + b - 1) // b


def _sublane(dtype):
    # Full packed vregs: 8 rows for f32, 16 for bf16, 32 for int8/fp8.
    return max(8, 32 // jnp.dtype(dtype).itemsize)


def _batch_tile(batch, dtype):
    # Minimize padding: split B into the fewest tiles of size <= 256, rounded
    # up to a full packed-vreg sublane count for the compute dtype.
    n = max(1, _cdiv(batch, 256))
    return _round_up(_cdiv(batch, n), _sublane(dtype))


def _pad_cast2(a, rows, cols, dtype):
    r, c = a.shape
    if (r, c) == (rows, cols):
        return a.astype(dtype)
    return jnp.zeros((rows, cols), dtype).at[:r, :c].set(a.astype(dtype))


class RecurrentParams(NamedTuple):
    w1t: jax.Array          # (i_pad, o_pad) = W1^T, padded, compute dtype
    w2t: jax.Array          # (o_pad, o_pad) = W2^T, padded, compute dtype
    b_row: jax.Array        # (1, o_pad) float32 bias row
    input_size: int
    output_size: int
    i_pad: int
    o_pad: int
    keep_prob: float
    compute_dtype: Any


def prepare_recurrent_params(w1, w2, b2, *, dp_keep_prob=1.0,
                             compute_dtype=jnp.bfloat16):
    """One-time weight prep (PyTorch layouts: w1 (O,I), w2 (O,O), b2 (O,))."""
    O, I = w1.shape
    assert w2.shape == (O, O) and b2.shape == (O,)
    assert 0.0 < dp_keep_prob <= 1.0

    i_pad = _round_up(I, _LANE)
    o_pad = _round_up(O, _LANE)

    w1t = jnp.zeros((i_pad, o_pad), compute_dtype).at[:I, :O].set(
        jnp.transpose(w1).astype(compute_dtype))
    w2t = jnp.zeros((o_pad, o_pad), compute_dtype).at[:O, :O].set(
        jnp.transpose(w2).astype(compute_dtype))
    b_row = jnp.zeros((1, o_pad), jnp.float32).at[0, :O].set(
        b2.astype(jnp.float32))
    return RecurrentParams(w1t, w2t, b_row, I, O, i_pad, o_pad,
                           float(dp_keep_prob), compute_dtype)


def _apply_dropout(x, keep_prob, seed):
    # TODO(synk): torch.nn.Dropout's exact RNG stream cannot be reproduced; the
    # mask is drawn with jax.random (same keep probability, inverted scaling).
    if keep_prob >= 1.0:
        return x
    key = jax.random.PRNGKey(seed)
    keep = jax.random.bernoulli(key, keep_prob, x.shape)
    return jnp.where(keep, x, jnp.zeros_like(x)) * (1.0 / keep_prob)


# ----------------------------------------------------------------------------
# Single-step kernel: out = tanh(x @ W1^T + h @ W2^T + b)  (two fused MXU dots)
# ----------------------------------------------------------------------------
def _recurrent_step_kernel(x_ref, h_ref, w1_ref, w2_ref, b_ref, o_ref):
    acc = jnp.dot(x_ref[...], w1_ref[...], preferred_element_type=jnp.float32)
    acc = acc + jnp.dot(h_ref[...], w2_ref[...],
                        preferred_element_type=jnp.float32)
    o_ref[...] = jnp.tanh(acc + b_ref[...]).astype(o_ref.dtype)


def recurrent_layer(params: RecurrentParams, w_x, w_h, *, seed=0):
    """One forward step: tanh(dropout(w_x) @ W1^T + w_h @ W2^T + b2)."""
    B, I = w_x.shape
    O = params.output_size
    assert I == params.input_size
    assert w_h.shape == (B, O)
    out_dtype = w_x.dtype
    cdt = params.compute_dtype
    i_pad, o_pad = params.i_pad, params.o_pad

    tm = _batch_tile(B, cdt)
    b_pad = _round_up(B, tm)

    x = _apply_dropout(w_x, params.keep_prob, seed)
    x_p = _pad_cast2(x, b_pad, i_pad, cdt)
    h_p = _pad_cast2(w_h, b_pad, o_pad, cdt)

    # Output-column tile: biggest of 512/256/128 whose double-buffered working
    # set stays inside the VMEM budget.
    isz = jnp.dtype(cdt).itemsize
    osz = jnp.dtype(out_dtype).itemsize

    def footprint(tn):
        blk = ((tm * i_pad + tm * o_pad) * isz          # x, h tiles
               + (i_pad + o_pad) * tn * isz             # W1^T, W2^T tiles
               + tn * 4                                 # bias tile (f32)
               + tm * tn * osz)                         # output tile
        return 2 * blk                                  # double buffering

    tn = _LANE
    for cand in (512, 256, 128):
        if o_pad % cand == 0 and footprint(cand) <= _VMEM_BUDGET:
            tn = cand
            break
    vmem_limit = int(min(max(footprint(tn) + 4 * _MIB, 16 * _MIB), 64 * _MIB))

    grid = (b_pad // tm, o_pad // tn)
    out = pl.pallas_call(
        _recurrent_step_kernel,
        grid_spec=pltpu.PrefetchScalarGridSpec(
            num_scalar_prefetch=0,
            grid=grid,
            in_specs=[
                pl.BlockSpec((tm, i_pad), lambda i, j: (i, 0)),    # x
                pl.BlockSpec((tm, o_pad), lambda i, j: (i, 0)),    # h
                pl.BlockSpec((i_pad, tn), lambda i, j: (0, j)),    # W1^T
                pl.BlockSpec((o_pad, tn), lambda i, j: (0, j)),    # W2^T
                pl.BlockSpec((1, tn), lambda i, j: (0, j)),        # bias
            ],
            out_specs=pl.BlockSpec((tm, tn), lambda i, j: (i, j)),
        ),
        out_shape=jax.ShapeDtypeStruct((b_pad, o_pad), out_dtype),
        compiler_params=pltpu.CompilerParams(
            dimension_semantics=("parallel", "parallel"),
            vmem_limit_bytes=vmem_limit),
    )(x_p, h_p, params.w1t, params.w2t, params.b_row)
    return out[:B, :O]


# ----------------------------------------------------------------------------
# Fused time-loop kernel: weights resident in VMEM across all timesteps,
# hidden state carried in a VMEM scratch (weight-stationary RNN).
# ----------------------------------------------------------------------------
def _recurrent_seq_kernel(x_ref, h0_ref, w1_ref, w2_ref, b_ref, o_ref, h_scr):
    t = pl.program_id(1)

    @pl.when(t == 0)
    def _():
        h_scr[...] = h0_ref[...]

    acc = jnp.dot(x_ref[0], w1_ref[...], preferred_element_type=jnp.float32)
    acc = acc + jnp.dot(h_scr[...], w2_ref[...],
                        preferred_element_type=jnp.float32)
    h_new = jnp.tanh(acc + b_ref[...])
    h_scr[...] = h_new.astype(h_scr.dtype)   # carry stays in compute dtype
    o_ref[0] = h_new.astype(o_ref.dtype)


def recurrent_sequence(params: RecurrentParams, xs, h0, *, seed=0):
    """Apply the layer over a whole sequence xs: (T, B, I), h0: (B, O)."""
    T, B, I = xs.shape
    O = params.output_size
    assert I == params.input_size
    assert h0.shape == (B, O)
    out_dtype = xs.dtype
    cdt = params.compute_dtype
    i_pad, o_pad = params.i_pad, params.o_pad

    tb = _batch_tile(B, cdt)
    b_pad = _round_up(B, tb)

    isz = jnp.dtype(cdt).itemsize
    osz = jnp.dtype(out_dtype).itemsize
    resident = (i_pad + o_pad) * o_pad * isz + o_pad * 4      # W1^T, W2^T, bias
    per_tile = (2 * tb * i_pad * isz          # x_t blocks (double buffered)
                + 2 * tb * o_pad * osz        # out blocks
                + 2 * tb * o_pad * isz        # h0 block
                + tb * o_pad * isz)           # h scratch
    footprint = resident + per_tile
    if footprint > _VMEM_BUDGET:
        # TODO(synk): for very large hidden sizes, stream the resident weight with
        # an inner pltpu.emit_pipeline; fall back to per-timestep calls for now.
        h, outs = h0, []
        for t in range(T):
            h = recurrent_layer(params, xs[t], h, seed=seed + t)
            outs.append(h)
        return jnp.stack(outs)

    x = _apply_dropout(xs, params.keep_prob, seed)     # fresh mask per timestep
    if x.shape == (T, b_pad, i_pad):
        x_p = x.astype(cdt)
    else:
        x_p = jnp.zeros((T, b_pad, i_pad), cdt).at[:, :B, :I].set(x.astype(cdt))
    h0_p = _pad_cast2(h0, b_pad, o_pad, cdt)

    vmem_limit = int(min(max(footprint + 4 * _MIB, 16 * _MIB), 64 * _MIB))

    grid = (b_pad // tb, T)     # batch tiles parallel (2nd TC on v7x), T serial
    out = pl.pallas_call(
        _recurrent_seq_kernel,
        grid_spec=pltpu.PrefetchScalarGridSpec(
            num_scalar_prefetch=0,
            grid=grid,
            in_specs=[
                pl.BlockSpec((1, tb, i_pad), lambda ib, t: (t, ib, 0)),    # x_t
                pl.BlockSpec((tb, o_pad), lambda ib, t: (ib, 0)),          # h0
                pl.BlockSpec((i_pad, o_pad), lambda ib, t: (0, 0)),        # W1^T (resident)
                pl.BlockSpec((o_pad, o_pad), lambda ib, t: (0, 0)),        # W2^T (resident)
                pl.BlockSpec((1, o_pad), lambda ib, t: (0, 0)),            # bias
            ],
            out_specs=pl.BlockSpec((1, tb, o_pad), lambda ib, t: (t, ib, 0)),
            scratch_shapes=[pltpu.VMEM((tb, o_pad), cdt)],
        ),
        out_shape=jax.ShapeDtypeStruct((T, b_pad, o_pad), out_dtype),
        compiler_params=pltpu.CompilerParams(
            dimension_semantics=("parallel", "arbitrary"),
            vmem_limit_bytes=vmem_limit),
    )(x_p, h0_p, params.w1t, params.w2t, params.b_row)
    return out[:, :B, :O]


# ----------------------------------------------------------------------------
# Pure-JAX reference (eval-mode dropout = identity).
# ----------------------------------------------------------------------------
def recurrent_layer_ref(w_x, w_h, w1, w2, b2):
    return jnp.tanh(w_x @ w1.T + w_h @ w2.T + b2[None, :])


if __name__ == "__main__":
    # Small shapes consistent with the module: batch B, input I, hidden O, seq T.
    B, I, O, T = 8, 64, 32, 8

    key = jax.random.PRNGKey(0)
    k_x, k_h, k_w1, k_w2, k_b, k_seq = jax.random.split(key, 6)

    # init_weights_uniform: U(-sqrt(1/O), +sqrt(1/O)).
    bound = (1.0 / O) ** 0.5
    w1 = jax.random.uniform(k_w1, (O, I), jnp.float32, -bound, bound)
    w2 = jax.random.uniform(k_w2, (O, O), jnp.float32, -bound, bound)
    b2 = jax.random.uniform(k_b, (O,), jnp.float32, -bound, bound)

    w_x = jax.random.normal(k_x, (B, I), jnp.float32)
    w_h = jax.random.normal(k_h, (B, O), jnp.float32)

    ref = recurrent_layer_ref(w_x, w_h, w1, w2, b2)

    # --- eval path (dropout identity), f32 compute: exact match to reference ---
    params_f32 = prepare_recurrent_params(w1, w2, b2, dp_keep_prob=1.0,
                                          compute_dtype=jnp.float32)
    out = jax.block_until_ready(recurrent_layer(params_f32, w_x, w_h))
    assert out.shape == (B, O)
    assert jnp.allclose(out, ref, atol=1e-5, rtol=1e-5), "eval-path mismatch"

    # --- default bf16 MXU path (f32 accumulate): looser tolerance ---
    params_bf16 = prepare_recurrent_params(w1, w2, b2, dp_keep_prob=1.0)
    out_bf16 = jax.block_until_ready(recurrent_layer(params_bf16, w_x, w_h))
    assert jnp.allclose(out_bf16, ref, atol=2e-2, rtol=2e-2), "bf16-path mismatch"

    # --- training path (dropout active): structural checks ---
    params_dp = prepare_recurrent_params(w1, w2, b2, dp_keep_prob=0.75,
                                         compute_dtype=jnp.float32)
    out_d1 = jax.block_until_ready(recurrent_layer(params_dp, w_x, w_h, seed=1))
    out_d2 = jax.block_until_ready(recurrent_layer(params_dp, w_x, w_h, seed=2))
    assert out_d1.shape == (B, O)
    assert bool(jnp.all(jnp.isfinite(out_d1)))
    assert bool(jnp.all(jnp.abs(out_d1) <= 1.0 + 1e-6))
    assert not jnp.allclose(out_d1, ref, atol=1e-4), "dropout mask not applied"
    assert not jnp.allclose(out_d1, out_d2, atol=1e-6), "seed has no effect"

    # --- fused time-loop kernel (weights resident across timesteps) ---
    xs = jax.random.normal(k_seq, (T, B, I), jnp.float32)
    seq_out = jax.block_until_ready(recurrent_sequence(params_f32, xs, w_h))
    h = w_h
    ref_steps = []
    for t in range(T):
        h = recurrent_layer_ref(xs[t], h, w1, w2, b2)
        ref_steps.append(h)
    ref_seq = jnp.stack(ref_steps)
    assert seq_out.shape == (T, B, O)
    assert jnp.allclose(seq_out, ref_seq, atol=1e-4, rtol=1e-4), "sequence mismatch"

    print("KERNEL_OK")
</pallas_src>

<mosaic_0001>
module attributes {stable_mosaic.version = 11 : i64} {
  func.func @_recurrent_step_kernel(%arg0: i32, %arg1: i32, %arg2: memref<8x128xf32, #tpu.memory_space<vmem>>, %arg3: memref<8x128xf32, #tpu.memory_space<vmem>>, %arg4: memref<128x128xf32, #tpu.memory_space<vmem>>, %arg5: memref<128x128xf32, #tpu.memory_space<vmem>>, %arg6: memref<1x128xf32, #tpu.memory_space<vmem>>, %arg7: memref<8x128xf32, #tpu.memory_space<vmem>>) attributes {dimension_semantics = [#tpu.dimension_semantics<parallel>, #tpu.dimension_semantics<parallel>], iteration_bounds = array<i64: 1, 1>, scalar_prefetch = 0 : i64, scratch_operands = 0 : i64, tpu.core_type = #tpu.core_type<tc>, window_params = [{transform_indices = @transform_0, window_bounds = array<i64: 8, 128>}, {transform_indices = @transform_1, window_bounds = array<i64: 8, 128>}, {transform_indices = @transform_2, window_bounds = array<i64: 128, 128>}, {transform_indices = @transform_3, window_bounds = array<i64: 128, 128>}, {transform_indices = @transform_4, window_bounds = array<i64: 1, 128>}, {transform_indices = @transform_5, window_bounds = array<i64: 8, 128>}]} {
    %c0 = arith.constant 0 : index
    %c0_0 = arith.constant 0 : index
    %0 = vector.load %arg2[%c0, %c0_0] : memref<8x128xf32, #tpu.memory_space<vmem>>, vector<8x128xf32>
    %c0_1 = arith.constant 0 : index
    %c0_2 = arith.constant 0 : index
    %1 = vector.load %arg4[%c0_1, %c0_2] : memref<128x128xf32, #tpu.memory_space<vmem>>, vector<128x128xf32>
    %cst = arith.constant dense<0.000000e+00> : vector<8x128xf32>
    %2 = tpu.matmul %0, %1, %cst {dimension_numbers = #tpu.dot_dimension_numbers<[1], [0], [0], [1], [0, 0, 1, 1], [], []>} : vector<8x128xf32>, vector<128x128xf32>, vector<8x128xf32> -> vector<8x128xf32>
    %c0_3 = arith.constant 0 : index
    %c0_4 = arith.constant 0 : index
    %3 = vector.load %arg3[%c0_3, %c0_4] : memref<8x128xf32, #tpu.memory_space<vmem>>, vector<8x128xf32>
    %c0_5 = arith.constant 0 : index
    %c0_6 = arith.constant 0 : index
    %4 = vector.load %arg5[%c0_5, %c0_6] : memref<128x128xf32, #tpu.memory_space<vmem>>, vector<128x128xf32>
    %cst_7 = arith.constant dense<0.000000e+00> : vector<8x128xf32>
    %5 = tpu.matmul %3, %4, %cst_7 {dimension_numbers = #tpu.dot_dimension_numbers<[1], [0], [0], [1], [0, 0, 1, 1], [], []>} : vector<8x128xf32>, vector<128x128xf32>, vector<8x128xf32> -> vector<8x128xf32>
    %6 = arith.addf %2, %5 : vector<8x128xf32>
    %c0_8 = arith.constant 0 : index
    %c0_9 = arith.constant 0 : index
    %7 = vector.load %arg6[%c0_8, %c0_9] : memref<1x128xf32, #tpu.memory_space<vmem>>, vector<1x128xf32>
    %8 = vector.broadcast %7 : vector<1x128xf32> to vector<8x128xf32>
    %9 = arith.addf %6, %8 : vector<8x128xf32>
    %10 = math.tanh %9 : vector<8x128xf32>
    %c0_10 = arith.constant 0 : index
    %c0_11 = arith.constant 0 : index
    %11 = vector.load %arg7[%c0_10, %c0_11] : memref<8x128xf32, #tpu.memory_space<vmem>>, vector<8x128xf32>
    tpu.vector_store %arg7[%c0_10, %c0_11], %10 {strides = array<i32>} : memref<8x128xf32, #tpu.memory_space<vmem>>, vector<8x128xf32>,
    return
  }
  func.func @transform_0(%arg0: i32, %arg1: i32) -> (i32, i32) {
    %c0_i32 = arith.constant 0 : i32
    %c0_i32_0 = arith.constant 0 : i32
    return %arg0, %c0_i32 : i32, i32
  }
  func.func @transform_1(%arg0: i32, %arg1: i32) -> (i32, i32) {
    %c0_i32 = arith.constant 0 : i32
    %c0_i32_0 = arith.constant 0 : i32
    return %arg0, %c0_i32 : i32, i32
  }
  func.func @transform_2(%arg0: i32, %arg1: i32) -> (i32, i32) {
    %c0_i32 = arith.constant 0 : i32
    %c0_i32_0 = arith.constant 0 : i32
    return %c0_i32, %arg1 : i32, i32
  }
  func.func @transform_3(%arg0: i32, %arg1: i32) -> (i32, i32) {
    %c0_i32 = arith.constant 0 : i32
    %c0_i32_0 = arith.constant 0 : i32
    return %c0_i32, %arg1 : i32, i32
  }
  func.func @transform_4(%arg0: i32, %arg1: i32) -> (i32, i32) {
    %c0_i32 = arith.constant 0 : i32
    %c0_i32_0 = arith.constant 0 : i32
    return %c0_i32, %arg1 : i32, i32
  }
  func.func @transform_5(%arg0: i32, %arg1: i32) -> (i32, i32) {
    %c0_i32 = arith.constant 0 : i32
    return %arg0, %arg1 : i32, i32
  }
}

</mosaic_0001>

<llo_original>
// kernel: tpu_custom_call.1
$region0: #{tpu_custom_call.1}
  #allocation0 [shape = 'u32[]', space=smem, size = 0x4, offset = 0x4, fixed_abs, tag = 'smem constant byte address 0x4 - core index']
  #allocation1 [shape = 'u32[144,128]{1,0:T(1,128)}', space=vmem, size = 0x12000, scoped, tag = 'internal scratch']
  %s0 = inlined_call_operand.hbm [shape: f32[8,128], index: 0, kind: input, shape index: {}]
  %s1 = inlined_call_operand.hbm [shape: f32[8,128], index: 1, kind: input, shape index: {}]
  %s2 = inlined_call_operand.hbm [shape: f32[128,128], index: 2, kind: input, shape index: {}]
  %s3 = inlined_call_operand.hbm [shape: f32[128,128], index: 3, kind: input, shape index: {}]
  %s4 = inlined_call_operand.vmem [shape: f32[1,128], index: 4, kind: input, shape index: {}]
  %s5 = inlined_call_operand.hbm [shape: f32[8,128], index: 5, kind: output, shape index: {}]
  %s6 = sld [smem:[#allocation0]]
  $region46: #{tpu_custom_call.1} parent=0
    _
  %s8 = ssub.s32 1, %s6
  %s9 = scalar_select 0, %s8, %s6
  $region1: #{tpu_custom_call.1} parent=0
    #allocation2 [shape = 'u8[4096]{0}', space=vmem, size = 0x1000, scoped, tag = 'input window, operand 0, single buffered']
    #allocation3 [shape = 's32[1]{0}', space=sflag, size = 0x4, scoped, tag = 'scoped memory for tpu_custom_call.1']
    #allocation4 [shape = 's32[1]{0}', space=sflag, size = 0x4, scoped, tag = 'scoped memory for tpu_custom_call.1']
    #allocation5 [shape = 'u8[4096]{0}', space=vmem, size = 0x1000, scoped, tag = 'input window, operand 1, single buffered']
    #allocation6 [shape = 's32[1]{0}', space=sflag, size = 0x4, scoped, tag = 'scoped memory for tpu_custom_call.1']
    #allocation7 [shape = 'u8[65536]{0}', space=vmem, size = 0x10000, scoped, tag = 'input window, operand 2, single buffered']
    #allocation8 [shape = 'u8[65536]{0}', space=vmem, size = 0x10000, scoped, tag = 'input window, operand 3, single buffered']
    #allocation9 [shape = 's32[1]{0}', space=sflag, size = 0x4, scoped, tag = 'scoped memory for tpu_custom_call.1']
    #allocation10 [shape = 'u8[4096]{0}', space=vmem, size = 0x1000, scoped, tag = 'output window, operand 0, single buffered']
    %10 = vsyncpa [#allocation3], 0
    %11 = vsyncpa [#allocation6], 0
    %12 = vsyncpa [#allocation9], 0
    %13 = vsyncpa [#allocation4], 0
    // Predicated region
    $region2: #{tpu_custom_call.1} parent=1 // pred_check
      _
    $region3: #{tpu_custom_call.1} parent=1 // pred_check_branch
      %15 = sbr.rel (0) target = $region5
    $region4: #{tpu_custom_call.1} parent=1 // pred_region
      %s17 = ssub.s32 128, 128
      %18 = vsyncadd [#allocation3], %s17
      %s20 = sshll.u32 [#allocation2], 4
      %s21 = int_to_ptr.vmem [resolvable:$true] %s20
      %23 = dma.hbm_to_vmem [thread:$0]  %s0, 128, %s21, [#allocation3]
    $region5: #{tpu_custom_call.1} parent=1 // pred_fallthru
      _
    // Predicated region
    $region6: #{tpu_custom_call.1} parent=1 // pred_check
      _
    $region7: #{tpu_custom_call.1} parent=1 // pred_check_branch
      %25 = sbr.rel (0) target = $region9
    $region8: #{tpu_custom_call.1} parent=1 // pred_region
      %s27 = ssub.s32 128, 128
      %28 = vsyncadd [#allocation6], %s27
      %s30 = sshll.u32 [#allocation5], 4
      %s31 = int_to_ptr.vmem [resolvable:$true] %s30
      %33 = dma.hbm_to_vmem [thread:$0]  %s1, 128, %s31, [#allocation6]
    $region9: #{tpu_custom_call.1} parent=1 // pred_fallthru
      _
    // Predicated region
    $region10: #{tpu_custom_call.1} parent=1 // pred_check
      _
    $region11: #{tpu_custom_call.1} parent=1 // pred_check_branch
      %35 = sbr.rel (0) target = $region13
    $region12: #{tpu_custom_call.1} parent=1 // pred_region
      %s37 = ssub.s32 2048, 2048
      %38 = vsyncadd [#allocation6], %s37
      %s39 = sshll.u32 [#allocation7], 4
      %s40 = int_to_ptr.vmem [resolvable:$true] %s39
      %45 = dma.hbm_to_vmem [thread:$0]  %s2, 2048, %s40, [#allocation6], 128, 128, 8
    $region13: #{tpu_custom_call.1} parent=1 // pred_fallthru
      _
    // Predicated region
    $region14: #{tpu_custom_call.1} parent=1 // pred_check
      _
    $region15: #{tpu_custom_call.1} parent=1 // pred_check_branch
      %47 = sbr.rel (0) target = $region17
    $region16: #{tpu_custom_call.1} parent=1 // pred_region
      %s49 = ssub.s32 2048, 2048
      %50 = vsyncadd [#allocation9], %s49
      %s51 = sshll.u32 [#allocation8], 4
      %s52 = int_to_ptr.vmem [resolvable:$true] %s51
      %57 = dma.hbm_to_vmem [thread:$0]  %s3, 2048, %s52, [#allocation9], 128, 128, 8
    $region17: #{tpu_custom_call.1} parent=1 // pred_fallthru
      _
    // Predicated region
    $region18: #{tpu_custom_call.1} parent=1 // pred_check
      _
    $region19: #{tpu_custom_call.1} parent=1 // pred_check_branch
      %59 = sbr.rel (0) target = $region21
    $region20: #{tpu_custom_call.1} parent=1 // pred_region
      _
    $region21: #{tpu_custom_call.1} parent=1 // pred_fallthru
      _
    // Predicated region
    $region22: #{tpu_custom_call.1} parent=1 // pred_check
      _
    $region23: #{tpu_custom_call.1} parent=1 // pred_check_branch
      %61 = sbr.rel (0) target = $region25
    $region24: #{tpu_custom_call.1} parent=1 // pred_region
      %62 = dma.done [#allocation3], 128
    $region25: #{tpu_custom_call.1} parent=1 // pred_fallthru
      _
    // Predicated region
    $region26: #{tpu_custom_call.1} parent=1 // pred_check
      _
    $region27: #{tpu_custom_call.1} parent=1 // pred_check_branch
      %64 = sbr.rel (0) target = $region29
    $region28: #{tpu_custom_call.1} parent=1 // pred_region
      %65 = dma.done [#allocation6], 128
    $region29: #{tpu_custom_call.1} parent=1 // pred_fallthru
      _
    // Predicated region
    $region30: #{tpu_custom_call.1} parent=1 // pred_check
      _
    $region31: #{tpu_custom_call.1} parent=1 // pred_check_branch
      %67 = sbr.rel (0) target = $region33
    $region32: #{tpu_custom_call.1} parent=1 // pred_region
      %68 = dma.done [#allocation6], 2048
    $region33: #{tpu_custom_call.1} parent=1 // pred_fallthru
      _
    // Predicated region
    $region34: #{tpu_custom_call.1} parent=1 // pred_check
      _
    $region35: #{tpu_custom_call.1} parent=1 // pred_check_branch
      %70 = sbr.rel (0) target = $region37
    $region36: #{tpu_custom_call.1} parent=1 // pred_region
      %71 = dma.done [#allocation9], 2048
    $region37: #{tpu_custom_call.1} parent=1 // pred_fallthru
      _
    %v72 = vld [vmem:[#allocation2] sm:$0xff]
    %v73 = vld [vmem:[#allocation7] sm:$0xff]
    %v74 = vld [vmem:[#allocation7 + $0x8] sm:$0xff]
    %v75 = vld [vmem:[#allocation7 + $0x10] sm:$0xff]
    %v76 = vld [vmem:[#allocation7 + $0x18] sm:$0xff]
    %v77 = vld [vmem:[#allocation7 + $0x20] sm:$0xff]
    %v78 = vld [vmem:[#allocation7 + $0x28] sm:$0xff]
    %v79 = vld [vmem:[#allocation7 + $0x30] sm:$0xff]
    %v80 = vld [vmem:[#allocation7 + $0x38] sm:$0xff]
    %v81 = vld [vmem:[#allocation7 + $0x40] sm:$0xff]
    %v82 = vld [vmem:[#allocation7 + $0x48] sm:$0xff]
    %v83 = vld [vmem:[#allocation7 + $0x50] sm:$0xff]
    %v84 = vld [vmem:[#allocation7 + $0x58] sm:$0xff]
    %v85 = vld [vmem:[#allocation7 + $0x60] sm:$0xff]
    %v86 = vld [vmem:[#allocation7 + $0x68] sm:$0xff]
    %v87 = vld [vmem:[#allocation7 + $0x70] sm:$0xff]
    %v88 = vld [vmem:[#allocation7 + $0x78] sm:$0xff]
    %v89 = vld [vmem:[#allocation5] sm:$0xff]
    %v90 = vld [vmem:[#allocation8] sm:$0xff]
    %v91 = vld [vmem:[#allocation8 + $0x8] sm:$0xff]
    %v92 = vld [vmem:[#allocation8 + $0x10] sm:$0xff]
    %v93 = vld [vmem:[#allocation8 + $0x18] sm:$0xff]
    %v94 = vld [vmem:[#allocation8 + $0x20] sm:$0xff]
    %v95 = vld [vmem:[#allocation8 + $0x28] sm:$0xff]
    %v96 = vld [vmem:[#allocation8 + $0x30] sm:$0xff]
    %v97 = vld [vmem:[#allocation8 + $0x38] sm:$0xff]
    %v98 = vld [vmem:[#allocation8 + $0x40] sm:$0xff]
    %v99 = vld [vmem:[#allocation8 + $0x48] sm:$0xff]
    %v100 = vld [vmem:[#allocation8 + $0x50] sm:$0xff]
    %v101 = vld [vmem:[#allocation8 + $0x58] sm:$0xff]
    %v102 = vld [vmem:[#allocation8 + $0x60] sm:$0xff]
    %v103 = vld [vmem:[#allocation8 + $0x68] sm:$0xff]
    %v104 = vld [vmem:[#allocation8 + $0x70] sm:$0xff]
    %v105 = vld [vmem:[#allocation8 + $0x78] sm:$0xff]
    %106 = vmatprep.subr.mxu0 0.0
    %107 = vmatpush1.msra.mxu0 %v90
    %108 = vmatprep.subr.mxu0 0.0
    %109 = vmatpush1.msra.mxu0 %v91
    %110 = vmatprep.subr.mxu0 0.0
    %111 = vmatpush1.msra.mxu0 %v92
    %112 = vmatprep.subr.mxu0 0.0
    %113 = vmatpush1.msra.mxu0 %v93
    %114 = vmatprep.subr.mxu0 0.0
    %115 = vmatpush1.msra.mxu0 %v94
    %116 = vmatprep.subr.mxu0 0.0
    %117 = vmatpush1.msra.mxu0 %v95
    %118 = vmatprep.subr.mxu0 0.0
    %119 = vmatpush1.msra.mxu0 %v96
    %120 = vmatprep.subr.mxu0 0.0
    %121 = vmatpush1.msra.mxu0 %v97
    %122 = vmatprep.subr.mxu0 0.0
    %123 = vmatpush1.msra.mxu0 %v98
    %124 = vmatprep.subr.mxu0 0.0
    %125 = vmatpush1.msra.mxu0 %v99
    %126 = vmatprep.subr.mxu0 0.0
    %127 = vmatpush1.msra.mxu0 %v100
    %128 = vmatprep.subr.mxu0 0.0
    %129 = vmatpush1.msra.mxu0 %v101
    %130 = vmatprep.subr.mxu0 0.0
    %131 = vmatpush1.msra.mxu0 %v102
    %132 = vmatprep.subr.mxu0 0.0
    %133 = vmatpush1.msra.mxu0 %v103
    %134 = vmatprep.subr.mxu0 0.0
    %135 = vmatpush1.msra.mxu0 %v104
    %136 = vmatprep.subr.mxu0 0.0
    %137 = vmatpush1.msra.mxu0 %v105
    %138 = vmatprep.subr.mxu0 0.0
    %139 = vmatpush1.msra.mxu0 0.0
    %140 = vmatprep.subr.mxu0 0.0
    %141 = vmatpush1.msra.mxu0 0.0
    %142 = vmatprep.subr.mxu0 0.0
    %143 = vmatpush1.msra.mxu0 0.0
    %144 = vmatprep.subr.mxu0 0.0
    %145 = vmatpush1.msra.mxu0 0.0
    %146 = vmatprep.subr.mxu0 0.0
    %147 = vmatpush1.msra.mxu0 0.0
    %148 = vmatprep.subr.mxu0 0.0
    %149 = vmatpush1.msra.mxu0 0.0
    %150 = vmatprep.subr.mxu0 0.0
    %151 = vmatpush1.msra.mxu0 0.0
    %152 = vmatprep.subr.mxu0 0.0
    %153 = vmatpush1.msra.mxu0 0.0
    %154 = vmatprep.subr.mxu0 0.0
    %155 = vmatpush1.msra.mxu0 0.0
    %156 = vmatprep.subr.mxu0 0.0
    %157 = vmatpush1.msra.mxu0 0.0
    %158 = vmatprep.subr.mxu0 0.0
    %159 = vmatpush1.msra.mxu0 0.0
    %160 = vmatprep.subr.mxu0 0.0
    %161 = vmatpush1.msra.mxu0 0.0
    %162 = vmatprep.subr.mxu0 0.0
    %163 = vmatpush1.msra.mxu0 0.0
    %164 = vmatprep.subr.mxu0 0.0
    %165 = vmatpush1.msra.mxu0 0.0
    %166 = vmatprep.subr.mxu0 0.0
    %167 = vmatpush1.msra.mxu0 0.0
    %168 = vmatprep.subr.mxu0 0.0
    %169 = vmatpush1.msra.mxu0 0.0
    %170 = vmatprep.mubr.f32.mxu0 0.0
    %171 = vmatmul.mubr.f32.gmra.mrb[0].mxu0 %v89
    %v172 = vpop.f32.mrb[0].mxu0
    %v173 = vadd.f32 0.0, %v172
    %v174 = vpop.f32.mrb[0].mxu0
    %175 = vdwg.mxu0
    %176 = vmatprep.subr.mxu0 0.0
    %177 = vmatpush1.msra.mxu0 %v73
    %178 = vmatprep.subr.mxu0 0.0
    %179 = vmatpush1.msra.mxu0 %v74
    %180 = vmatprep.subr.mxu0 0.0
    %181 = vmatpush1.msra.mxu0 %v75
    %182 = vmatprep.subr.mxu0 0.0
    %183 = vmatpush1.msra.mxu0 %v76
    %184 = vmatprep.subr.mxu0 0.0
    %185 = vmatpush1.msra.mxu0 %v77
    %186 = vmatprep.subr.mxu0 0.0
    %187 = vmatpush1.msra.mxu0 %v78
    %188 = vmatprep.subr.mxu0 0.0
    %189 = vmatpush1.msra.mxu0 %v79
    %190 = vmatprep.subr.mxu0 0.0
    %191 = vmatpush1.msra.mxu0 %v80
    %192 = vmatprep.subr.mxu0 0.0
    %193 = vmatpush1.msra.mxu0 %v81
    %194 = vmatprep.subr.mxu0 0.0
    %195 = vmatpush1.msra.mxu0 %v82
    %196 = vmatprep.subr.mxu0 0.0
    %197 = vmatpush1.msra.mxu0 %v83
    %198 = vmatprep.subr.mxu0 0.0
    %199 = vmatpush1.msra.mxu0 %v84
    %200 = vmatprep.subr.mxu0 0.0
    %201 = vmatpush1.msra.mxu0 %v85
    %202 = vmatprep.subr.mxu0 0.0
    %203 = vmatpush1.msra.mxu0 %v86
    %204 = vmatprep.subr.mxu0 0.0
    %205 = vmatpush1.msra.mxu0 %v87
    %206 = vmatprep.subr.mxu0 0.0
    %207 = vmatpush1.msra.mxu0 %v88
    %208 = vmatprep.subr.mxu0 0.0
    %209 = vmatpush1.msra.mxu0 0.0
    %210 = vmatprep.subr.mxu0 0.0
    %211 = vmatpush1.msra.mxu0 0.0
    %212 = vmatprep.subr.mxu0 0.0
    %213 = vmatpush1.msra.mxu0 0.0
    %214 = vmatprep.subr.mxu0 0.0
    %215 = vmatpush1.msra.mxu0 0.0
    %216 = vmatprep.subr.mxu0 0.0
    %217 = vmatpush1.msra.mxu0 0.0
    %218 = vmatprep.subr.mxu0 0.0
    %219 = vmatpush1.msra.mxu0 0.0
    %220 = vmatprep.subr.mxu0 0.0
    %221 = vmatpush1.msra.mxu0 0.0
    %222 = vmatprep.subr.mxu0 0.0
    %223 = vmatpush1.msra.mxu0 0.0
    %224 = vmatprep.subr.mxu0 0.0
    %225 = vmatpush1.msra.mxu0 0.0
    %226 = vmatprep.subr.mxu0 0.0
    %227 = vmatpush1.msra.mxu0 0.0
    %228 = vmatprep.subr.mxu0 0.0
    %229 = vmatpush1.msra.mxu0 0.0
    %230 = vmatprep.subr.mxu0 0.0
    %231 = vmatpush1.msra.mxu0 0.0
    %232 = vmatprep.subr.mxu0 0.0
    %233 = vmatpush1.msra.mxu0 0.0
    %234 = vmatprep.subr.mxu0 0.0
    %235 = vmatpush1.msra.mxu0 0.0
    %236 = vmatprep.subr.mxu0 0.0
    %237 = vmatpush1.msra.mxu0 0.0
    %238 = vmatprep.subr.mxu0 0.0
    %239 = vmatpush1.msra.mxu0 0.0
    %240 = vmatprep.mubr.f32.mxu0 0.0
    %241 = vmatmul.mubr.f32.gmra.mrb[0].mxu0 %v72
    %v242 = vpop.f32.mrb[0].mxu0
    %v243 = vadd.f32 %v173, %v242
    %v244 = vpop.f32.mrb[0].mxu0
    %245 = vdwg.mxu0
    %v246 = vld [vmem:[%s4] sm:$0x1]
    %v248 = vlaneseq
    %v249 = vshrl.u32 %v248, 7
    %v250 = vsub.s32 0, %v249
    %v251 = vrot.slane %v246, %v250
    %v253 = vadd.f32 %v243, %v251
    %v254 = vtanh.pop %v253
    %255 = vst [vmem:[#allocation10] sm:$0xff] %v254
    // Predicated region
    $region38: #{tpu_custom_call.1} parent=1 // pred_check
      _
    $region39: #{tpu_custom_call.1} parent=1 // pred_check_branch
      %257 = sbr.rel (0) target = $region41
    $region40: #{tpu_custom_call.1} parent=1 // pred_region
      %s259 = ssub.s32 128, 128
      %260 = vsyncadd [#allocation4], %s259
      %s262 = sshll.u32 [#allocation10], 4
      %s263 = int_to_ptr.vmem [resolvable:$true] %s262
      %265 = dma.vmem_to_hbm [thread:$0]  %s263, 128, %s5, [#allocation4]
    $region41: #{tpu_custom_call.1} parent=1 // pred_fallthru
      _
    // Predicated region
    $region42: #{tpu_custom_call.1} parent=1 // pred_check
      _
    $region43: #{tpu_custom_call.1} parent=1 // pred_check_branch
      %267 = sbr.rel (0) target = $region45
    $region44: #{tpu_custom_call.1} parent=1 // pred_region
      %268 = dma.done [#allocation4], 128
    $region45: #{tpu_custom_call.1} parent=1 // pred_fallthru
      _
    %269 = vsyncpa [#allocation3], 1
    %270 = vsyncpa [#allocation6], 1
    %271 = vsyncpa [#allocation9], 1
    %272 = vsyncpa [#allocation4], 1

</llo_original>
